<compile_context>
chip_gen: v7x
topology: tpu7x:2x2x1
jax: 0.10.0
libtpu: 0.0.40
codegen_flags: <defaults>
</compile_context>

<pallas_src>
import functools

import jax
import jax.numpy as jnp
from jax.experimental import pallas as pl
from jax.experimental.pallas import tpu as pltpu

_LANE_CANDIDATES = (1024, 512, 256, 128)
_MIN_PALLAS_BYTES = 1 << 20  # below this, let XLA fuse the 4-op chain itself


def _elementwise_kernel(x_ref, o_ref):
    x = x_ref[...]
    # Exact op order of the PyTorch module: ((x + 2) * 3 - 4) / 5
    o_ref[...] = (((x + 2.0) * 3.0 - 4.0) / 5.0).astype(o_ref.dtype)


def _choose_lane(n_pad):
    """Pick a lane width (multiple of 128) for the flattened slab.

    First pass prefers the widest lane whose row count is a multiple of 8 so
    every (8,128) vreg tile is full (unmasked loads/stores); second pass falls
    back to the widest divisor.
    """
    for cand in _LANE_CANDIDATES:
        rows = n_pad // cand
        if n_pad % cand == 0 and rows >= 8 and rows % 8 == 0:
            return cand
    for cand in _LANE_CANDIDATES:
        if n_pad % cand == 0:
            return cand
    return 128  # unreachable: n_pad is always a multiple of 128


def _tile_params():
    """(target tile elems, vmem_limit_bytes) tuned per TPU generation."""
    try:
        kind = jax.devices()[0].device_kind.lower()
    except Exception:  # pragma: no cover - e.g. no devices at trace time
        kind = ""
    if "v5 lite" in kind or "v5e" in kind or "v5lite" in kind:
        # v5e (~0.82 TB/s): 2 MiB tiles already amortize the ~0.35 us step
        # overhead; scoped-VMEM default is only 16 MiB, so stay small and set
        # a modest explicit limit for headroom.
        return 512 * 1024, 32 << 20
    # v6e / v7x (and default): 6 MiB tiles cut grid steps 3x; 4 buffers x 6 MiB
    # = 24 MiB exceeds the 32 MiB scoped default, so raise it — 48 MiB stays
    # well inside v7x's 64 MiB physical per-TC VMEM (and v6e's 128 MiB).
    return 1536 * 1024, 48 << 20


@functools.partial(jax.jit, static_argnames=("force_pallas",))
def pt_module_forward(x, force_pallas=False):
    assert jnp.issubdtype(x.dtype, jnp.floating), (
        "kernel asserts a floating dtype to keep bit-parity with torch"
    )
    orig_shape = x.shape
    orig_dtype = x.dtype
    n = x.size
    itemsize = jnp.dtype(orig_dtype).itemsize

    # ---- tiny inputs: a single fused XLA pass beats a pallas_call launch ----
    if not force_pallas and n * itemsize < _MIN_PALLAS_BYTES:
        return ((x + 2.0) * 3.0 - 4.0) / 5.0

    # ---- flatten to a lane-dense 2D slab (rows, lane) ----
    n_pad = ((n + 127) // 128) * 128  # pad only to the next multiple of 128
    flat = x.reshape(-1)
    if n_pad != n:
        # Under jit this pad fuses with the surrounding reshapes; the padded
        # tail (<128 elems) is computed and sliced off at the end.
        flat = jnp.pad(flat, (0, n_pad - n))

    lane = _choose_lane(n_pad)
    rows = n_pad // lane
    x2d = flat.reshape(rows, lane)

    # ---- row tile: generation-tuned size, always a multiple of 8 sublanes ----
    target_tile_elems, vmem_limit = _tile_params()
    tile_r = max(8, target_tile_elems // lane)  # multiple of 8 by construction
    if tile_r >= rows:
        tile_r = rows  # single block == full array extent (legal block shape)

    grid = (pl.cdiv(rows, tile_r),)

    out2d = pl.pallas_call(
        _elementwise_kernel,
        out_shape=jax.ShapeDtypeStruct((rows, lane), orig_dtype),
        grid_spec=pl.GridSpec(
            grid=grid,
            in_specs=[pl.BlockSpec((tile_r, lane), lambda i: (i, 0))],
            out_specs=pl.BlockSpec((tile_r, lane), lambda i: (i, 0)),
        ),
        compiler_params=pltpu.CompilerParams(
            # Embarrassingly parallel tile loop: lets v7x shard across both
            # TensorCores; harmless on single-TC v5e/v6e.
            dimension_semantics=("parallel",),
            vmem_limit_bytes=vmem_limit,
        ),
        cost_estimate=pl.CostEstimate(
            flops=4 * n_pad,
            transcendentals=0,
            bytes_accessed=2 * n_pad * itemsize,
        ),
    )(x2d)

    flat_out = out2d.reshape(-1)
    if n_pad != n:
        flat_out = flat_out[:n]
    return flat_out.reshape(orig_shape)


def _reference(x):
    return ((x + 2.0) * 3.0 - 4.0) / 5.0


if __name__ == "__main__":
    key = jax.random.PRNGKey(0)
    k0, k1 = jax.random.split(key)

    # Main test input (module-consistent small shape); force the Pallas path
    # so the kernel itself is exercised even though a tensor this small would
    # normally take the fused-XLA fast path.
    x = jax.random.normal(k0, (2, 4, 16, 16), dtype=jnp.float32)
    y = pt_module_forward(x, force_pallas=True)
    jax.block_until_ready(y)
    y_ref = _reference(x)
    assert y.shape == x.shape and y.dtype == x.dtype
    assert jnp.allclose(y, y_ref, atol=1e-6, rtol=1e-6)

    # Default path (small-size cutoff → plain fused XLA) must match too.
    y_fast = pt_module_forward(x)
    jax.block_until_ready(y_fast)
    assert jnp.allclose(y_fast, y_ref, atol=1e-6, rtol=1e-6)

    # Ragged element count (255 elems): exercises the pad-to-128 + slice path.
    x_ragged = jax.random.normal(k1, (3, 5, 17), dtype=jnp.float32)
    y_ragged = pt_module_forward(x_ragged, force_pallas=True)
    jax.block_until_ready(y_ragged)
    assert y_ragged.shape == x_ragged.shape
    assert jnp.allclose(y_ragged, _reference(x_ragged), atol=1e-6, rtol=1e-6)

    print("KERNEL_OK")
</pallas_src>

<mosaic_0001>
module attributes {stable_mosaic.version = 11 : i64} {
  func.func @_elementwise_kernel(%arg0: i32, %arg1: memref<8x256xf32, #tpu.memory_space<vmem>>, %arg2: memref<8x256xf32, #tpu.memory_space<vmem>>) attributes {dimension_semantics = [#tpu.dimension_semantics<parallel>], iteration_bounds = array<i64: 1>, scalar_prefetch = 0 : i64, scratch_operands = 0 : i64, tpu.core_type = #tpu.core_type<tc>, window_params = [{transform_indices = @transform_0, window_bounds = array<i64: 8, 256>}, {transform_indices = @transform_1, window_bounds = array<i64: 8, 256>}]} {
    %c0 = arith.constant 0 : index
    %c0_0 = arith.constant 0 : index
    %0 = vector.load %arg1[%c0, %c0_0] : memref<8x256xf32, #tpu.memory_space<vmem>>, vector<8x256xf32>
    %cst = arith.constant 2.000000e+00 : f32
    %1 = vector.broadcast %cst : f32 to vector<8x256xf32>
    %2 = arith.addf %0, %1 : vector<8x256xf32>
    %cst_1 = arith.constant 3.000000e+00 : f32
    %3 = vector.broadcast %cst_1 : f32 to vector<8x256xf32>
    %4 = arith.mulf %2, %3 : vector<8x256xf32>
    %cst_2 = arith.constant 4.000000e+00 : f32
    %5 = vector.broadcast %cst_2 : f32 to vector<8x256xf32>
    %6 = arith.subf %4, %5 : vector<8x256xf32>
    %cst_3 = arith.constant 5.000000e+00 : f32
    %7 = vector.broadcast %cst_3 : f32 to vector<8x256xf32>
    %8 = arith.divf %6, %7 : vector<8x256xf32>
    %c0_4 = arith.constant 0 : index
    %c0_5 = arith.constant 0 : index
    %9 = vector.load %arg2[%c0_4, %c0_5] : memref<8x256xf32, #tpu.memory_space<vmem>>, vector<8x256xf32>
    tpu.vector_store %arg2[%c0_4, %c0_5], %8 {strides = array<i32>} : memref<8x256xf32, #tpu.memory_space<vmem>>, vector<8x256xf32>,
    return
  }
  func.func @transform_0(%arg0: i32) -> (i32, i32) {
    %c0_i32 = arith.constant 0 : i32
    %c0_i32_0 = arith.constant 0 : i32
    return %arg0, %c0_i32 : i32, i32
  }
  func.func @transform_1(%arg0: i32) -> (i32, i32) {
    %c0_i32 = arith.constant 0 : i32
    %c0_i32_0 = arith.constant 0 : i32
    return %arg0, %c0_i32 : i32, i32
  }
}

</mosaic_0001>

<llo_original>
// kernel: pt_module_forward.1
$region0: #{pt_module_forward.1}
  #allocation0 [shape = 'u32[]', space=smem, size = 0x4, offset = 0x4, fixed_abs, tag = 'smem constant byte address 0x4 - core index']
  #allocation1 [shape = 'u32[144,128]{1,0:T(1,128)}', space=vmem, size = 0x12000, scoped, tag = 'internal scratch']
  %s0 = inlined_call_operand.vmem [shape: f32[8,256], index: 0, kind: input, shape index: {}]
  %s1 = inlined_call_operand.vmem [shape: f32[8,256], index: 1, kind: output, shape index: {}]
  %s2 = sld [smem:[#allocation0]]
  $region14: #{pt_module_forward.1} parent=0
    _
  %s4 = ssub.s32 1, %s2
  %s5 = scalar_select 0, %s4, %s2
  // Predicated region
  $region2: #{pt_module_forward.1} parent=0 // pred_check
    _
  $region3: #{pt_module_forward.1} parent=0 // pred_check_branch
    %7 = sbr.rel (0) target = $region5
  $region4: #{pt_module_forward.1} parent=0 // pred_region
    _
  $region5: #{pt_module_forward.1} parent=0 // pred_fallthru
    _
  %v8 = vld [vmem:[%s0] sm:$0xff]
  %v9 = vld [vmem:[%s0 + $0x8] sm:$0xff]
  %v10 = vadd.f32 %v8, 2.0
  %v11 = vadd.f32 %v9, 2.0
  %v12 = vmul.f32 %v10, 3.0
  %v13 = vmul.f32 %v11, 3.0
  %v14 = vsub.f32 %v12, 4.0
  %v15 = vsub.f32 %v13, 4.0
  %v16 = vrcp.pop 5.0
  %v17 = vmul.f32 %v14, %v16
  %v18 = vmul.f32 %v15, %v16
  %19 = vst [vmem:[%s1] sm:$0xff] %v17
  %20 = vst [vmem:[%s1 + $0x8] sm:$0xff] %v18
  // Predicated region
  $region6: #{pt_module_forward.1} parent=0 // pred_check
    _
  $region7: #{pt_module_forward.1} parent=0 // pred_check_branch
    %22 = sbr.rel (0) target = $region9
  $region8: #{pt_module_forward.1} parent=0 // pred_region
    _
  $region9: #{pt_module_forward.1} parent=0 // pred_fallthru
    _
  // Predicated region
  $region10: #{pt_module_forward.1} parent=0 // pred_check
    _
  $region11: #{pt_module_forward.1} parent=0 // pred_check_branch
    %24 = sbr.rel (0) target = $region13
  $region12: #{pt_module_forward.1} parent=0 // pred_region
    _
  $region13: #{pt_module_forward.1} parent=0 // pred_fallthru
    _

</llo_original>
